<compile_context>
chip_gen: v7x
topology: tpu7x:2x2x1
jax: 0.10.0
libtpu: 0.0.40
codegen_flags: <defaults>
</compile_context>

<pallas_src>
import jax
import jax.numpy as jnp
from jax.experimental import pallas as pl
from jax.experimental.pallas import tpu as pltpu


def _round_up(x, m):
    return (x + m - 1) // m * m


def generator_kernel(z_ref, w1_ref, b1_ref, w2_ref, b2_ref, o_ref):
    # fc1: low-precision MXU operands, f32 accumulation.
    h = jnp.dot(z_ref[...], w1_ref[...], preferred_element_type=jnp.float32)
    h = h + b1_ref[...]                       # bias add in f32 (VPU)
    # LeakyReLU, PyTorch default negative_slope=0.01:
    # max(h, 0.01*h) == where(h > 0, h, 0.01*h) for slope < 1, one op cheaper.
    h = jnp.maximum(h, 0.01 * h)
    # fc2: cast the f32 hidden activations back to the MXU operand dtype.
    y = jnp.dot(h.astype(w2_ref.dtype), w2_ref[...],
                preferred_element_type=jnp.float32)
    y = y + b2_ref[...]
    o_ref[...] = jnp.tanh(y).astype(o_ref.dtype)   # tanh in f32 on the EUP


def generator_forward(z, w1, b1, w2, b2, *,
                      batch_tile=2048,
                      compute_dtype=jnp.bfloat16,
                      out_dtype=None,
                      vmem_limit_bytes=32 * 1024 * 1024,
                      vmem_budget_bytes=24 * 1024 * 1024):
    """Fused Generator forward (mode='mnist').

    z:  [B, D_in]    input noise
    w1: [H, D_in]    fc1 weight (nn.Linear layout: [out, in])
    b1: [H]          fc1 bias
    w2: [D_out, H]   fc2 weight
    b2: [D_out]      fc2 bias
    """
    B, D_in = z.shape
    H, D_in_w = w1.shape
    D_out, H_w = w2.shape
    assert D_in_w == D_in and H_w == H
    assert b1.shape == (H,) and b2.shape == (D_out,)

    out_dtype = z.dtype if out_dtype is None else jnp.dtype(out_dtype)
    compute_dtype = jnp.dtype(compute_dtype)

    # --- Lane-dense output: pad D_out up to a multiple of 128 (sliced off at the end).
    D_out_p = _round_up(D_out, 128)
    if D_out_p != D_out:
        w2 = jnp.pad(w2, ((0, D_out_p - D_out), (0, 0)))
        b2 = jnp.pad(b2, (0, D_out_p - D_out))

    # Weights pre-transposed to [in, out] and cast once; biases stay f32 (tiny).
    w1_t = w1.T.astype(compute_dtype)                 # [D_in, H]
    w2_t = w2.T.astype(compute_dtype)                 # [H, D_out_p]
    b1_2d = b1.reshape(1, H).astype(jnp.float32)
    b2_2d = b2.reshape(1, D_out_p).astype(jnp.float32)
    z_c = z.astype(compute_dtype)

    # --- Batch tile: round to the MXU M granule, clamp for small batches,
    #     then shrink until the VMEM footprint fits the budget.
    granule = 256 if B >= 256 else 8
    tile = min(batch_tile, _round_up(B, granule))
    tile = max(granule, _round_up(tile, granule))

    comp_bytes = compute_dtype.itemsize
    out_bytes_per = jnp.dtype(out_dtype).itemsize

    def _vmem_estimate(t):
        io = (2 * t * D_in * comp_bytes            # double-buffered z tiles
              + 2 * t * D_out_p * out_bytes_per)   # double-buffered out tiles
        weights = (D_in * H + H * D_out_p) * comp_bytes + (H + D_out_p) * 4
        temps = t * (H + D_out_p) * 4              # f32 intermediates h, y
        return io + weights + temps

    while tile > granule and _vmem_estimate(tile) > vmem_budget_bytes:
        tile -= granule

    B_pad = _round_up(B, tile)
    if B_pad != B:
        z_c = jnp.pad(z_c, ((0, B_pad - B), (0, 0)))

    grid = (B_pad // tile,)

    bytes_accessed = (
        B_pad * D_in * comp_bytes
        + (D_in * H + H * D_out_p) * comp_bytes
        + (H + D_out_p) * 4
        + B_pad * D_out_p * out_bytes_per
    )
    cost = pl.CostEstimate(
        flops=2 * B_pad * (D_in * H + H * D_out_p),
        transcendentals=B_pad * D_out_p,             # tanh per output element
        bytes_accessed=bytes_accessed,
    )

    out = pl.pallas_call(
        generator_kernel,
        out_shape=jax.ShapeDtypeStruct((B_pad, D_out_p), out_dtype),
        grid_spec=pltpu.PrefetchScalarGridSpec(
            num_scalar_prefetch=0,
            grid=grid,
            in_specs=[
                pl.BlockSpec((tile, D_in), lambda i: (i, 0)),     # z tile (pipelined)
                pl.BlockSpec((D_in, H), lambda i: (0, 0)),        # W1^T (resident)
                pl.BlockSpec((1, H), lambda i: (0, 0)),           # b1   (resident)
                pl.BlockSpec((H, D_out_p), lambda i: (0, 0)),     # W2^T (resident)
                pl.BlockSpec((1, D_out_p), lambda i: (0, 0)),     # b2   (resident)
            ],
            out_specs=pl.BlockSpec((tile, D_out_p), lambda i: (i, 0)),  # lane-dense
        ),
        compiler_params=pltpu.CompilerParams(
            dimension_semantics=("parallel",),
            vmem_limit_bytes=vmem_limit_bytes),
        cost_estimate=cost,
    )(z_c, w1_t, b1_2d, w2_t, b2_2d)

    return out[:B, :D_out]


def init_params(key, input_dim, hidden_dim, output_dim, dtype=jnp.float32):
    """Synthetic init matching the PyTorch module's shapes:
       xavier_normal_ for weights (stored [out, in] like nn.Linear),
       default nn.Linear uniform init for biases."""
    k1, k2, k3, k4 = jax.random.split(key, 4)

    def xavier_normal(k, fan_out, fan_in):
        std = (2.0 / (fan_in + fan_out)) ** 0.5
        return (std * jax.random.normal(k, (fan_out, fan_in))).astype(dtype)

    def bias_uniform(k, fan_out, fan_in):
        bound = 1.0 / (fan_in ** 0.5)
        return jax.random.uniform(k, (fan_out,), minval=-bound,
                                  maxval=bound).astype(dtype)

    w1 = xavier_normal(k1, hidden_dim, input_dim)    # [H, D_in]
    b1 = bias_uniform(k2, hidden_dim, input_dim)     # [H]
    w2 = xavier_normal(k3, output_dim, hidden_dim)   # [D_out, H]
    b2 = bias_uniform(k4, output_dim, hidden_dim)    # [D_out]
    return w1, b1, w2, b2


def reference_forward(z, w1, b1, w2, b2):
    h = z @ w1.T + b1
    h = jnp.where(h > 0, h, 0.01 * h)
    return jnp.tanh(h @ w2.T + b2)


if __name__ == "__main__":
    # Small shapes consistent with the module.  B=12 is deliberately NOT a
    # multiple of the tile (exercises batch padding) and D_out=200 is NOT a
    # multiple of 128 (exercises the lane-dense output padding path).
    B, D_in, H, D_out = 12, 32, 64, 200

    key = jax.random.PRNGKey(0)
    k_z, k_p = jax.random.split(key)
    z = jax.random.normal(k_z, (B, D_in), dtype=jnp.float32)
    w1, b1, w2, b2 = init_params(k_p, D_in, H, D_out)

    # Default path: bf16 MXU operands, f32 elementwise math, f32 output.
    out = generator_forward(z, w1, b1, w2, b2)
    out = jax.block_until_ready(out)

    y_ref = reference_forward(z, w1, b1, w2, b2)
    assert out.shape == (B, D_out)
    assert out.dtype == z.dtype
    # bf16 matmul operands -> loosened tolerance vs. the f32 reference.
    assert jnp.allclose(out, y_ref, atol=2e-2, rtol=2e-2)

    # Also exercise the bf16-output store path (halves the writeback stream).
    out_bf16 = generator_forward(z, w1, b1, w2, b2, out_dtype=jnp.bfloat16)
    out_bf16 = jax.block_until_ready(out_bf16)
    assert out_bf16.shape == (B, D_out)
    assert out_bf16.dtype == jnp.bfloat16
    assert jnp.allclose(out_bf16.astype(jnp.float32), y_ref, atol=3e-2, rtol=3e-2)

    # TODO(synk): 'gaussian' mode (4-layer ReLU MLP) not implemented; only the
    # default 'mnist' path is realized in the fused kernel.
    print("KERNEL_OK")
</pallas_src>

<mosaic_0001>
module attributes {stable_mosaic.version = 11 : i64} {
  func.func @generator_kernel(%arg0: i32, %arg1: memref<16x32xbf16, #tpu.memory_space<vmem>>, %arg2: memref<32x64xbf16, #tpu.memory_space<vmem>>, %arg3: memref<1x64xf32, #tpu.memory_space<vmem>>, %arg4: memref<64x256xbf16, #tpu.memory_space<vmem>>, %arg5: memref<1x256xf32, #tpu.memory_space<vmem>>, %arg6: memref<16x256xf32, #tpu.memory_space<vmem>>) attributes {dimension_semantics = [#tpu.dimension_semantics<parallel>], iteration_bounds = array<i64: 1>, scalar_prefetch = 0 : i64, scratch_operands = 0 : i64, tpu.core_type = #tpu.core_type<tc>, window_params = [{transform_indices = @transform_0, window_bounds = array<i64: 16, 32>}, {pipeline_mode = #tpu.pipeline_mode<synchronous>, transform_indices = @transform_1, window_bounds = array<i64: 32, 64>}, {pipeline_mode = #tpu.pipeline_mode<synchronous>, transform_indices = @transform_2, window_bounds = array<i64: 1, 64>}, {pipeline_mode = #tpu.pipeline_mode<synchronous>, transform_indices = @transform_3, window_bounds = array<i64: 64, 256>}, {pipeline_mode = #tpu.pipeline_mode<synchronous>, transform_indices = @transform_4, window_bounds = array<i64: 1, 256>}, {transform_indices = @transform_5, window_bounds = array<i64: 16, 256>}]} {
    %c0 = arith.constant 0 : index
    %c0_0 = arith.constant 0 : index
    %0 = vector.load %arg1[%c0, %c0_0] : memref<16x32xbf16, #tpu.memory_space<vmem>>, vector<16x32xbf16>
    %c0_1 = arith.constant 0 : index
    %c0_2 = arith.constant 0 : index
    %1 = vector.load %arg2[%c0_1, %c0_2] : memref<32x64xbf16, #tpu.memory_space<vmem>>, vector<32x64xbf16>
    %cst = arith.constant dense<0.000000e+00> : vector<16x64xf32>
    %2 = tpu.matmul %0, %1, %cst {dimension_numbers = #tpu.dot_dimension_numbers<[1], [0], [0], [1], [0, 0, 1, 1], [], []>} : vector<16x32xbf16>, vector<32x64xbf16>, vector<16x64xf32> -> vector<16x64xf32>
    %c0_3 = arith.constant 0 : index
    %c0_4 = arith.constant 0 : index
    %3 = vector.load %arg3[%c0_3, %c0_4] : memref<1x64xf32, #tpu.memory_space<vmem>>, vector<1x64xf32>
    %4 = vector.broadcast %3 : vector<1x64xf32> to vector<16x64xf32>
    %5 = arith.addf %2, %4 : vector<16x64xf32>
    %cst_5 = arith.constant 0.00999999977 : f32
    %6 = vector.broadcast %cst_5 : f32 to vector<16x64xf32>
    %7 = arith.mulf %6, %5 : vector<16x64xf32>
    %8 = arith.maximumf %5, %7 : vector<16x64xf32>
    %9 = arith.truncf %8 : vector<16x64xf32> to vector<16x64xbf16>
    %c0_6 = arith.constant 0 : index
    %c0_7 = arith.constant 0 : index
    %10 = vector.load %arg4[%c0_6, %c0_7] : memref<64x256xbf16, #tpu.memory_space<vmem>>, vector<64x256xbf16>
    %cst_8 = arith.constant dense<0.000000e+00> : vector<16x256xf32>
    %11 = tpu.matmul %9, %10, %cst_8 {dimension_numbers = #tpu.dot_dimension_numbers<[1], [0], [0], [1], [0, 0, 1, 1], [], []>} : vector<16x64xbf16>, vector<64x256xbf16>, vector<16x256xf32> -> vector<16x256xf32>
    %c0_9 = arith.constant 0 : index
    %c0_10 = arith.constant 0 : index
    %12 = vector.load %arg5[%c0_9, %c0_10] : memref<1x256xf32, #tpu.memory_space<vmem>>, vector<1x256xf32>
    %13 = vector.broadcast %12 : vector<1x256xf32> to vector<16x256xf32>
    %14 = arith.addf %11, %13 : vector<16x256xf32>
    %15 = math.tanh %14 : vector<16x256xf32>
    %c0_11 = arith.constant 0 : index
    %c0_12 = arith.constant 0 : index
    %16 = vector.load %arg6[%c0_11, %c0_12] : memref<16x256xf32, #tpu.memory_space<vmem>>, vector<16x256xf32>
    tpu.vector_store %arg6[%c0_11, %c0_12], %15 {strides = array<i32>} : memref<16x256xf32, #tpu.memory_space<vmem>>, vector<16x256xf32>,
    return
  }
  func.func @transform_0(%arg0: i32) -> (i32, i32) {
    %c0_i32 = arith.constant 0 : i32
    %c0_i32_0 = arith.constant 0 : i32
    return %arg0, %c0_i32 : i32, i32
  }
  func.func @transform_1(%arg0: i32) -> (i32, i32) {
    %c0_i32 = arith.constant 0 : i32
    %c0_i32_0 = arith.constant 0 : i32
    %c0_i32_1 = arith.constant 0 : i32
    return %c0_i32, %c0_i32_0 : i32, i32
  }
  func.func @transform_2(%arg0: i32) -> (i32, i32) {
    %c0_i32 = arith.constant 0 : i32
    %c0_i32_0 = arith.constant 0 : i32
    %c0_i32_1 = arith.constant 0 : i32
    return %c0_i32, %c0_i32_0 : i32, i32
  }
  func.func @transform_3(%arg0: i32) -> (i32, i32) {
    %c0_i32 = arith.constant 0 : i32
    %c0_i32_0 = arith.constant 0 : i32
    %c0_i32_1 = arith.constant 0 : i32
    return %c0_i32, %c0_i32_0 : i32, i32
  }
  func.func @transform_4(%arg0: i32) -> (i32, i32) {
    %c0_i32 = arith.constant 0 : i32
    %c0_i32_0 = arith.constant 0 : i32
    %c0_i32_1 = arith.constant 0 : i32
    return %c0_i32, %c0_i32_0 : i32, i32
  }
  func.func @transform_5(%arg0: i32) -> (i32, i32) {
    %c0_i32 = arith.constant 0 : i32
    %c0_i32_0 = arith.constant 0 : i32
    return %arg0, %c0_i32 : i32, i32
  }
}

</mosaic_0001>

<llo_original>
// kernel: tpu_custom_call.1
$region0: #{tpu_custom_call.1}
  #allocation0 [shape = 'u32[]', space=smem, size = 0x4, offset = 0x4, fixed_abs, tag = 'smem constant byte address 0x4 - core index']
  #allocation1 [shape = 'u32[144,128]{1,0:T(1,128)}', space=vmem, size = 0x12000, scoped, tag = 'internal scratch']
  %s0 = inlined_call_operand.hbm [shape: bf16[16,32], index: 0, kind: input, shape index: {}]
  %s1 = inlined_call_operand.hbm [shape: bf16[32,64], index: 1, kind: input, shape index: {}]
  %s2 = inlined_call_operand.vmem [shape: f32[1,64], index: 2, kind: input, shape index: {}]
  %s3 = inlined_call_operand.hbm [shape: bf16[64,256], index: 3, kind: input, shape index: {}]
  %s4 = inlined_call_operand.vmem [shape: f32[1,256], index: 4, kind: input, shape index: {}]
  %s5 = inlined_call_operand.hbm [shape: f32[16,256], index: 5, kind: output, shape index: {}]
  %s6 = sld [smem:[#allocation0]]
  $region42: #{tpu_custom_call.1} parent=0
    _
  %s8 = ssub.s32 1, %s6
  %s9 = scalar_select 0, %s8, %s6
  $region1: #{tpu_custom_call.1} parent=0
    #allocation2 [shape = 'u8[4096]{0}', space=vmem, size = 0x1000, scoped, tag = 'input window, operand 0, single buffered']
    #allocation3 [shape = 's32[1]{0}', space=sflag, size = 0x4, scoped, tag = 'scoped memory for tpu_custom_call.1']
    #allocation4 [shape = 's32[1]{0}', space=sflag, size = 0x4, scoped, tag = 'scoped memory for tpu_custom_call.1']
    #allocation5 [shape = 'u8[8192]{0}', space=vmem, size = 0x2000, scoped, tag = 'input window, operand 1, single buffered']
    #allocation6 [shape = 's32[1]{0}', space=sflag, size = 0x4, scoped, tag = 'scoped memory for tpu_custom_call.1']
    #allocation7 [shape = 'u8[32768]{0}', space=vmem, size = 0x8000, scoped, tag = 'input window, operand 3, single buffered']
    #allocation8 [shape = 'u8[16384]{0}', space=vmem, size = 0x4000, scoped, tag = 'output window, operand 0, single buffered']
    %10 = vsyncpa [#allocation3], 0
    %11 = vsyncpa [#allocation6], 0
    %12 = vsyncpa [#allocation4], 0
    // Predicated region
    $region2: #{tpu_custom_call.1} parent=1 // pred_check
      _
    $region3: #{tpu_custom_call.1} parent=1 // pred_check_branch
      %14 = sbr.rel (0) target = $region5
    $region4: #{tpu_custom_call.1} parent=1 // pred_region
      %s16 = ssub.s32 128, 128
      %17 = vsyncadd [#allocation3], %s16
      %s18 = sshll.u32 [#allocation2], 4
      %s19 = int_to_ptr.vmem [resolvable:$true] %s18
      %24 = dma.hbm_to_vmem [thread:$0]  %s0, 128, %s19, [#allocation3], 64, 64, 4
    $region5: #{tpu_custom_call.1} parent=1 // pred_fallthru
      _
    // Predicated region
    $region6: #{tpu_custom_call.1} parent=1 // pred_check
      _
    $region7: #{tpu_custom_call.1} parent=1 // pred_check_branch
      %26 = sbr.rel (0) target = $region9
    $region8: #{tpu_custom_call.1} parent=1 // pred_region
      %s28 = ssub.s32 256, 256
      %29 = vsyncadd [#allocation6], %s28
      %s30 = sshll.u32 [#allocation5], 4
      %s31 = int_to_ptr.vmem [resolvable:$true] %s30
      %36 = dma.hbm_to_vmem [thread:$0]  %s1, 256, %s31, [#allocation6], 64, 64, 4
    $region9: #{tpu_custom_call.1} parent=1 // pred_fallthru
      _
    // Predicated region
    $region10: #{tpu_custom_call.1} parent=1 // pred_check
      _
    $region11: #{tpu_custom_call.1} parent=1 // pred_check_branch
      %38 = sbr.rel (0) target = $region13
    $region12: #{tpu_custom_call.1} parent=1 // pred_region
      _
    $region13: #{tpu_custom_call.1} parent=1 // pred_fallthru
      _
    // Predicated region
    $region14: #{tpu_custom_call.1} parent=1 // pred_check
      _
    $region15: #{tpu_custom_call.1} parent=1 // pred_check_branch
      %40 = sbr.rel (0) target = $region17
    $region16: #{tpu_custom_call.1} parent=1 // pred_region
      %s42 = ssub.s32 1024, 1024
      %43 = vsyncadd [#allocation6], %s42
      %s44 = sshll.u32 [#allocation7], 4
      %s45 = int_to_ptr.vmem [resolvable:$true] %s44
      %50 = dma.hbm_to_vmem [thread:$0]  %s3, 1024, %s45, [#allocation6], 128, 128, 8
    $region17: #{tpu_custom_call.1} parent=1 // pred_fallthru
      _
    // Predicated region
    $region18: #{tpu_custom_call.1} parent=1 // pred_check
      _
    $region19: #{tpu_custom_call.1} parent=1 // pred_check_branch
      %52 = sbr.rel (0) target = $region21
    $region20: #{tpu_custom_call.1} parent=1 // pred_region
      _
    $region21: #{tpu_custom_call.1} parent=1 // pred_fallthru
      _
    // Predicated region
    $region22: #{tpu_custom_call.1} parent=1 // pred_check
      _
    $region23: #{tpu_custom_call.1} parent=1 // pred_check_branch
      %54 = sbr.rel (0) target = $region25
    $region24: #{tpu_custom_call.1} parent=1 // pred_region
      %55 = dma.done [#allocation3], 128
    $region25: #{tpu_custom_call.1} parent=1 // pred_fallthru
      _
    // Predicated region
    $region26: #{tpu_custom_call.1} parent=1 // pred_check
      _
    $region27: #{tpu_custom_call.1} parent=1 // pred_check_branch
      %57 = sbr.rel (0) target = $region29
    $region28: #{tpu_custom_call.1} parent=1 // pred_region
      %58 = dma.done [#allocation6], 256
    $region29: #{tpu_custom_call.1} parent=1 // pred_fallthru
      _
    // Predicated region
    $region30: #{tpu_custom_call.1} parent=1 // pred_check
      _
    $region31: #{tpu_custom_call.1} parent=1 // pred_check_branch
      %60 = sbr.rel (0) target = $region33
    $region32: #{tpu_custom_call.1} parent=1 // pred_region
      %61 = dma.done [#allocation6], 1024
    $region33: #{tpu_custom_call.1} parent=1 // pred_fallthru
      _
    %v63 = vld [vmem:[#allocation2] sm:$0xf]
    %v64 = vld [vmem:[#allocation2 + $0x4] sm:$0xf]
    %v65 = vld [vmem:[#allocation5] sm:$0xf]
    %v66 = vld [vmem:[#allocation5 + $0x4] sm:$0xf]
    %v67 = vld [vmem:[#allocation5 + $0x8] sm:$0xf]
    %v68 = vld [vmem:[#allocation5 + $0xc] sm:$0xf]
    %v69 = vld [vmem:[%s2] sm:$0x1]
    %v71 = vlaneseq
    %v72 = vshrl.u32 %v71, 7
    %v73 = vsub.s32 0, %v72
    %v74 = vrot.slane %v69, %v73
    %v78 = vunpack.c.l.b16 %v63
    %v79 = vunpack.c.l.b16 %v64
    %v80 = vpack.c.b16 %v79, %v78
    %v85 = vunpack.c.l.b16 %v65
    %v86 = vunpack.c.l.b16 %v66
    %v87 = vunpack.c.l.b16 %v67
    %v88 = vunpack.c.l.b16 %v68
    %v89 = vpack.c.b16 %v86, %v85
    %v90 = vpack.c.b16 %v88, %v87
    %vm93 = vcmask 261120
    %v95 = vsel %vm93, %v80, 0
    %97 = vmatprep.subr.bf16.mxu0 0
    %98 = vmatpush1.bf16.msra.mxu0 %v89
    %99 = vmatprep.subr.bf16.mxu0 0
    %100 = vmatpush1.bf16.msra.mxu0 %v90
    %101 = vmatprep.subr.bf16.mxu0 0
    %102 = vmatpush1.bf16.msra.mxu0 0
    %103 = vmatprep.subr.bf16.mxu0 0
    %104 = vmatpush1.bf16.msra.mxu0 0
    %105 = vmatprep.subr.bf16.mxu0 0
    %106 = vmatpush1.bf16.msra.mxu0 0
    %107 = vmatprep.subr.bf16.mxu0 0
    %108 = vmatpush1.bf16.msra.mxu0 0
    %109 = vmatprep.subr.bf16.mxu0 0
    %110 = vmatpush1.bf16.msra.mxu0 0
    %111 = vmatprep.subr.bf16.mxu0 0
    %112 = vmatpush1.bf16.msra.mxu0 0
    %113 = vmatprep.subr.bf16.mxu0 0
    %114 = vmatpush1.bf16.msra.mxu0 0
    %115 = vmatprep.subr.bf16.mxu0 0
    %116 = vmatpush1.bf16.msra.mxu0 0
    %117 = vmatprep.subr.bf16.mxu0 0
    %118 = vmatpush1.bf16.msra.mxu0 0
    %119 = vmatprep.subr.bf16.mxu0 0
    %120 = vmatpush1.bf16.msra.mxu0 0
    %121 = vmatprep.subr.bf16.mxu0 0
    %122 = vmatpush1.bf16.msra.mxu0 0
    %123 = vmatprep.subr.bf16.mxu0 0
    %124 = vmatpush1.bf16.msra.mxu0 0
    %125 = vmatprep.subr.bf16.mxu0 0
    %126 = vmatpush1.bf16.msra.mxu0 0
    %127 = vmatprep.subr.bf16.mxu0 0
    %128 = vmatpush1.bf16.msra.mxu0 0
    %129 = vmatprep.mubr.bf16.mxu0 0
    %130 = vmatmul.mubr.bf16.gmra.mrb[0].mxu0 %v95
    %v131 = vpop.f32.mrb[0].mxu0
    %v132 = vadd.f32 %v74, %v131
    %v133 = vpop.f32.mrb[0].mxu0
    %v134 = vpop.f32.mrb[0].mxu0
    %v135 = vadd.f32 %v74, %v134
    %v136 = vpop.f32.mrb[0].mxu0
    %137 = vdwg.mxu0
    %v138 = vmul.f32 %v132, 0.01
    %v139 = vmul.f32 %v135, 0.01
    %v140 = vmax.f32 %v132, %v138
    %v141 = vmax.f32 %v135, %v139
    %v142 = vpack.c.bf16 %v141, %v140
    %v143 = vld [vmem:[#allocation7] sm:$0xff]
    %v144 = vld [vmem:[#allocation7 + $0x8] sm:$0xff]
    %v145 = vld [vmem:[#allocation7 + $0x10] sm:$0xff]
    %v146 = vld [vmem:[#allocation7 + $0x18] sm:$0xff]
    %v147 = vld [vmem:[#allocation7 + $0x20] sm:$0xff]
    %v148 = vld [vmem:[#allocation7 + $0x28] sm:$0xff]
    %v149 = vld [vmem:[#allocation7 + $0x30] sm:$0xff]
    %v150 = vld [vmem:[#allocation7 + $0x38] sm:$0xff]
    %v151 = vld [vmem:[%s4] sm:$0x3]
    %v153 = vlaneseq
    %v154 = vshrl.u32 %v153, 7
    %v155 = vsub.s32 0, %v154
    %v156 = vrot.slane %v151, %v155
    %v157 = vlaneseq
    %v158 = vshrl.u32 %v157, 7
    %v159 = vsub.s32 1, %v158
    %v160 = vrot.slane %v151, %v159
    %v171 = vunpack.c.l.b16 %v143
    %v172 = vunpack.c.h.b16 %v143
    %v173 = vunpack.c.l.b16 %v144
    %v174 = vunpack.c.h.b16 %v144
    %v175 = vunpack.c.l.b16 %v145
    %v176 = vunpack.c.h.b16 %v145
    %v177 = vunpack.c.l.b16 %v146
    %v178 = vunpack.c.h.b16 %v146
    %v179 = vunpack.c.l.b16 %v147
    %v180 = vunpack.c.h.b16 %v147
    %v181 = vunpack.c.l.b16 %v148
    %v182 = vunpack.c.h.b16 %v148
    %v183 = vunpack.c.l.b16 %v149
    %v184 = vunpack.c.h.b16 %v149
    %v185 = vunpack.c.l.b16 %v150
    %v186 = vunpack.c.h.b16 %v150
    %v187 = vpack.c.b16 %v173, %v171
    %v188 = vpack.c.b16 %v174, %v172
    %v189 = vpack.c.b16 %v177, %v175
    %v190 = vpack.c.b16 %v178, %v176
    %v191 = vpack.c.b16 %v181, %v179
    %v192 = vpack.c.b16 %v182, %v180
    %v193 = vpack.c.b16 %v185, %v183
    %v194 = vpack.c.b16 %v186, %v184
    %vm203 = vcmask 523264
    %v205 = vsel %vm203, %v142, 0
    %207 = vmatprep.subr.bf16.mxu0 %v188
    %208 = vmatpush1.bf16.msra.mxu0 %v187
    %209 = vmatprep.subr.bf16.mxu0 %v190
    %210 = vmatpush1.bf16.msra.mxu0 %v189
    %211 = vmatprep.subr.bf16.mxu0 %v192
    %212 = vmatpush1.bf16.msra.mxu0 %v191
    %213 = vmatprep.subr.bf16.mxu0 %v194
    %214 = vmatpush1.bf16.msra.mxu0 %v193
    %215 = vmatprep.subr.bf16.mxu0 0
    %216 = vmatpush1.bf16.msra.mxu0 0
    %217 = vmatprep.subr.bf16.mxu0 0
    %218 = vmatpush1.bf16.msra.mxu0 0
    %219 = vmatprep.subr.bf16.mxu0 0
    %220 = vmatpush1.bf16.msra.mxu0 0
    %221 = vmatprep.subr.bf16.mxu0 0
    %222 = vmatpush1.bf16.msra.mxu0 0
    %223 = vmatprep.subr.bf16.mxu0 0
    %224 = vmatpush1.bf16.msra.mxu0 0
    %225 = vmatprep.subr.bf16.mxu0 0
    %226 = vmatpush1.bf16.msra.mxu0 0
    %227 = vmatprep.subr.bf16.mxu0 0
    %228 = vmatpush1.bf16.msra.mxu0 0
    %229 = vmatprep.subr.bf16.mxu0 0
    %230 = vmatpush1.bf16.msra.mxu0 0
    %231 = vmatprep.subr.bf16.mxu0 0
    %232 = vmatpush1.bf16.msra.mxu0 0
    %233 = vmatprep.subr.bf16.mxu0 0
    %234 = vmatpush1.bf16.msra.mxu0 0
    %235 = vmatprep.subr.bf16.mxu0 0
    %236 = vmatpush1.bf16.msra.mxu0 0
    %237 = vmatprep.subr.bf16.mxu0 0
    %238 = vmatpush1.bf16.msra.mxu0 0
    %239 = vmatprep.mubr.bf16.mxu0 0
    %240 = vmatmul.mubr.bf16.gmra.mrb[0].mxu0 %v205
    %v241 = vpop.f32.mrb[0].mxu0
    %v242 = vadd.f32 %v156, %v241
    %v243 = vpop.f32.mrb[0].mxu0
    %v244 = vadd.f32 %v160, %v243
    %v245 = vpop.f32.mrb[0].mxu0
    %v246 = vadd.f32 %v156, %v245
    %v247 = vpop.f32.mrb[0].mxu0
    %v248 = vadd.f32 %v160, %v247
    %249 = vdwg.mxu0
    %v250 = vtanh.pop %v242
    %v251 = vtanh.pop %v244
    %v252 = vtanh.pop %v246
    %v253 = vtanh.pop %v248
    %254 = vst [vmem:[#allocation8] sm:$0xff] %v250
    %255 = vst [vmem:[#allocation8 + $0x8] sm:$0xff] %v251
    %256 = vst [vmem:[#allocation8 + $0x10] sm:$0xff] %v252
    %257 = vst [vmem:[#allocation8 + $0x18] sm:$0xff] %v253
    // Predicated region
    $region34: #{tpu_custom_call.1} parent=1 // pred_check
      _
    $region35: #{tpu_custom_call.1} parent=1 // pred_check_branch
      %259 = sbr.rel (0) target = $region37
    $region36: #{tpu_custom_call.1} parent=1 // pred_region
      %s261 = ssub.s32 512, 512
      %262 = vsyncadd [#allocation4], %s261
      %s263 = sshll.u32 [#allocation8], 4
      %s264 = int_to_ptr.vmem [resolvable:$true] %s263
      %269 = dma.vmem_to_hbm [thread:$0]  %s264, 512, %s5, [#allocation4], 256, 256, 16
    $region37: #{tpu_custom_call.1} parent=1 // pred_fallthru
      _
    // Predicated region
    $region38: #{tpu_custom_call.1} parent=1 // pred_check
      _
    $region39: #{tpu_custom_call.1} parent=1 // pred_check_branch
      %271 = sbr.rel (0) target = $region41
    $region40: #{tpu_custom_call.1} parent=1 // pred_region
      %272 = dma.done [#allocation4], 512
    $region41: #{tpu_custom_call.1} parent=1 // pred_fallthru
      _
    %273 = vsyncpa [#allocation3], 1
    %274 = vsyncpa [#allocation6], 1
    %275 = vsyncpa [#allocation4], 1

</llo_original>
